<compile_context>
chip_gen: v7x
topology: tpu7x:2x2x1
jax: 0.10.0
libtpu: 0.0.40
codegen_flags: <defaults>
</compile_context>

<pallas_src>
import functools
import math

import jax
import jax.numpy as jnp
from jax.experimental import pallas as pl
from jax.experimental.pallas import tpu as pltpu


# ------------------------------ tiling helpers ------------------------------

def _round_up(n, m):
    return ((n + m - 1) // m) * m


def _attn_tiles(t):
    """(t_pad, tq, tk) for the flash-attention grid.

    tk is lane-constrained by the [B, 1, T] key-bias block (multiple of 128 or
    the full padded length); tq only needs to be a multiple of 8.
    """
    if t <= 256:                       # short sequences: one tile each way
        tp = _round_up(t, 8)
        return tp, tp, tp
    tp = _round_up(t, 128)
    tq = 128
    tk = 256 if tp % 256 == 0 else 128
    return tp, tq, tk


def _pick_row_tile(n, target=512):
    """Largest row tile <= target dividing n (n is always a multiple of 8)."""
    if n <= target:
        return n
    t = (target // 8) * 8
    while t >= 8:
        if n % t == 0:
            return t
        t -= 8
    return 8


_PARALLEL1 = pltpu.CompilerParams(dimension_semantics=("parallel",))


# ------------------------------ Pallas kernels ------------------------------

def _qkv_proj_kernel(x_ref, m_ref, wq_ref, bq_ref, wkv_ref, bkv_ref,
                     q_ref, kv_ref, *, mask_in, compute_dtype):
    """Row-tiled fused Q and K|V projections.

    x_ref: [tile_n, C], m_ref: [tile_n, 1], wq: [C, C] (1/sqrt(dk) folded in),
    wkv: [C, 2C].  Outputs q: [tile_n, C], kv: [tile_n, 2C] in compute_dtype.
    """
    x = x_ref[...]
    if mask_in:
        x = x * m_ref[...]
    xc = x.astype(compute_dtype)
    q = jnp.dot(xc, wq_ref[...], preferred_element_type=jnp.float32) + bq_ref[...]
    kv = jnp.dot(xc, wkv_ref[...], preferred_element_type=jnp.float32) + bkv_ref[...]
    q_ref[...] = q.astype(q_ref.dtype)
    kv_ref[...] = kv.astype(kv_ref.dtype)


def _flash_attn_kernel(q_ref, kv_ref, bias_ref, x_ref, m_ref,
                       wo_ref, bo_ref, g_ref, b_ref, o_ref,
                       m_sc, l_sc, acc_sc, *,
                       n_heads, eps, mask_residual, compute_dtype):
    """Flash attention (all heads) + conv_o + residual + LayerNorm.

    grid = (B, T/tq, T/tk); the kv axis (last) is a reduction.
    q_ref: [1, tq, C] (already scaled), kv_ref: [1, tk, 2C],
    bias_ref: [1, 1, tk] additive key mask (0 / -1e4),
    x_ref: [1, tq, C] residual, m_ref: [1, tq, 1] 0/1 mask,
    wo: [C, C], bo/g/b: [1, C], o_ref: [1, tq, C].
    Scratch: m_sc/l_sc: [n_heads, tq, 1] f32, acc_sc: [tq, C] f32.
    """
    ki = pl.program_id(2)
    nk = pl.num_programs(2)
    tq = q_ref.shape[1]
    C = q_ref.shape[2]
    dk = C // n_heads

    @pl.when(ki == 0)
    def _():
        m_sc[...] = jnp.full_like(m_sc, -jnp.inf)
        l_sc[...] = jnp.zeros_like(l_sc)
        acc_sc[...] = jnp.zeros_like(acc_sc)

    q = q_ref[0].astype(compute_dtype)        # [tq, C]
    kv = kv_ref[0].astype(compute_dtype)      # [tk, 2C]
    bias = bias_ref[0]                        # [1, tk] f32

    dn = (((1,), (1,)), ((), ()))             # contract q axis 1 with k axis 1
    for h in range(n_heads):                  # static unroll over heads
        sl = slice(h * dk, (h + 1) * dk)
        qh = q[:, sl]                         # [tq, dk]
        kh = kv[:, sl]                        # [tk, dk]
        vh = kv[:, C + h * dk: C + (h + 1) * dk]
        s = jax.lax.dot_general(qh, kh, dn,
                                preferred_element_type=jnp.float32) + bias
        m_prev = m_sc[h]                      # [tq, 1]
        m_new = jnp.maximum(m_prev, jnp.max(s, axis=-1, keepdims=True))
        alpha = jnp.exp(m_prev - m_new)
        p = jnp.exp(s - m_new)
        l_sc[h] = alpha * l_sc[h] + jnp.sum(p, axis=-1, keepdims=True)
        acc_sc[:, sl] = alpha * acc_sc[:, sl] + jnp.dot(
            p.astype(compute_dtype), vh, preferred_element_type=jnp.float32)
        m_sc[h] = m_new

    @pl.when(ki == nk - 1)
    def _():
        wo = wo_ref[...]
        y = jnp.zeros((tq, C), jnp.float32)
        for h in range(n_heads):              # per-head accumulated projection
            sl = slice(h * dk, (h + 1) * dk)
            inv_l = pl.reciprocal(l_sc[h], approx=True)     # EUP slot
            oh = (acc_sc[:, sl] * inv_l).astype(compute_dtype)
            y = y + jnp.dot(oh, wo[sl, :], preferred_element_type=jnp.float32)
        y = y + bo_ref[...]
        xres = x_ref[0]
        if mask_residual:                     # layer 0: residual is x * x_mask
            xres = xres * m_ref[0]
        r = xres + y
        mean = jnp.mean(r, axis=-1, keepdims=True)
        var = jnp.mean((r - mean) ** 2, axis=-1, keepdims=True)
        rn = (r - mean) * jax.lax.rsqrt(var + eps)
        o_ref[0] = (rn * g_ref[...] + b_ref[...]).astype(o_ref.dtype)


def _ffn_ln_kernel(x_ref, m_ref, w1_ref, b1_ref, w2_ref, b2_ref, g_ref, be_ref,
                   o_ref, *, eps, mask_out, compute_dtype):
    """Row-tiled fused FFN (1x1 convs) + residual + LayerNorm."""
    x = x_ref[...]
    m = m_ref[...]
    xm = (x * m).astype(compute_dtype)
    h = jnp.dot(xm, w1_ref[...], preferred_element_type=jnp.float32) + b1_ref[...]
    h = jnp.maximum(h, 0.0)                   # activation=None -> relu
    # NOTE: inner `h * m` dropped (per-row mask commutes with the feature
    # contraction; the trailing `* m` below makes it mathematically dead).
    y = (jnp.dot(h.astype(compute_dtype), w2_ref[...],
                 preferred_element_type=jnp.float32) + b2_ref[...]) * m
    r = x + y
    mean = jnp.mean(r, axis=-1, keepdims=True)
    var = jnp.mean((r - mean) ** 2, axis=-1, keepdims=True)
    rn = (r - mean) * jax.lax.rsqrt(var + eps)
    out = rn * g_ref[...] + be_ref[...]
    if mask_out:                              # last layer: trailing x * x_mask
        out = out * m
    o_ref[...] = out.astype(o_ref.dtype)


# ------------------------------ wrappers ------------------------------

def qkv_proj(x2d, mask2d, wq, bq, wkv, bkv, *, mask_in, tile_n, compute_dtype):
    N, C = x2d.shape
    C2 = wkv.shape[1]
    kern = functools.partial(_qkv_proj_kernel, mask_in=mask_in,
                             compute_dtype=compute_dtype)
    return pl.pallas_call(
        kern,
        out_shape=(jax.ShapeDtypeStruct((N, C), compute_dtype),
                   jax.ShapeDtypeStruct((N, C2), compute_dtype)),
        grid=(N // tile_n,),
        in_specs=[
            pl.BlockSpec((tile_n, C), lambda i: (i, 0)),
            pl.BlockSpec((tile_n, 1), lambda i: (i, 0)),
            pl.BlockSpec((C, C), lambda i: (0, 0)),
            pl.BlockSpec((1, C), lambda i: (0, 0)),
            pl.BlockSpec((C, C2), lambda i: (0, 0)),
            pl.BlockSpec((1, C2), lambda i: (0, 0)),
        ],
        out_specs=(pl.BlockSpec((tile_n, C), lambda i: (i, 0)),
                   pl.BlockSpec((tile_n, C2), lambda i: (i, 0))),
        compiler_params=_PARALLEL1,
    )(x2d, mask2d, wq, bq.reshape(1, C), wkv, bkv.reshape(1, C2))


def attn_block(q, kv, bias, x, x_mask, wo, bo, g, b, *, n_heads, mask_residual,
               tq, tk, compute_dtype, eps=1e-5):
    B, T, C = x.shape
    kern = functools.partial(_flash_attn_kernel, n_heads=n_heads, eps=eps,
                             mask_residual=mask_residual,
                             compute_dtype=compute_dtype)
    return pl.pallas_call(
        kern,
        out_shape=jax.ShapeDtypeStruct((B, T, C), x.dtype),
        grid=(B, T // tq, T // tk),
        in_specs=[
            pl.BlockSpec((1, tq, C), lambda bb, qi, ki: (bb, qi, 0)),    # q
            pl.BlockSpec((1, tk, 2 * C), lambda bb, qi, ki: (bb, ki, 0)),  # k|v
            pl.BlockSpec((1, 1, tk), lambda bb, qi, ki: (bb, 0, ki)),    # bias
            pl.BlockSpec((1, tq, C), lambda bb, qi, ki: (bb, qi, 0)),    # resid
            pl.BlockSpec((1, tq, 1), lambda bb, qi, ki: (bb, qi, 0)),    # mask
            pl.BlockSpec((C, C), lambda bb, qi, ki: (0, 0)),             # wo
            pl.BlockSpec((1, C), lambda bb, qi, ki: (0, 0)),             # bo
            pl.BlockSpec((1, C), lambda bb, qi, ki: (0, 0)),             # gamma
            pl.BlockSpec((1, C), lambda bb, qi, ki: (0, 0)),             # beta
        ],
        out_specs=pl.BlockSpec((1, tq, C), lambda bb, qi, ki: (bb, qi, 0)),
        scratch_shapes=[
            pltpu.VMEM((n_heads, tq, 1), jnp.float32),   # running max
            pltpu.VMEM((n_heads, tq, 1), jnp.float32),   # running denom
            pltpu.VMEM((tq, C), jnp.float32),            # un-normalized out
        ],
        compiler_params=pltpu.CompilerParams(
            dimension_semantics=("parallel", "parallel", "arbitrary")),
    )(q, kv, bias, x, x_mask, wo, bo.reshape(1, C), g.reshape(1, C),
      b.reshape(1, C))


def ffn_ln(x2d, mask2d, w1, bf1, w2, bf2, g, b, *, mask_out, tile_n,
           compute_dtype, eps=1e-5):
    N, C = x2d.shape
    F = w1.shape[1]
    kern = functools.partial(_ffn_ln_kernel, eps=eps, mask_out=mask_out,
                             compute_dtype=compute_dtype)
    return pl.pallas_call(
        kern,
        out_shape=jax.ShapeDtypeStruct((N, C), x2d.dtype),
        grid=(N // tile_n,),
        in_specs=[
            pl.BlockSpec((tile_n, C), lambda i: (i, 0)),
            pl.BlockSpec((tile_n, 1), lambda i: (i, 0)),
            pl.BlockSpec((C, F), lambda i: (0, 0)),
            pl.BlockSpec((1, F), lambda i: (0, 0)),
            pl.BlockSpec((F, C), lambda i: (0, 0)),
            pl.BlockSpec((1, C), lambda i: (0, 0)),
            pl.BlockSpec((1, C), lambda i: (0, 0)),
            pl.BlockSpec((1, C), lambda i: (0, 0)),
        ],
        out_specs=pl.BlockSpec((tile_n, C), lambda i: (i, 0)),
        compiler_params=_PARALLEL1,
    )(x2d, mask2d, w1, bf1.reshape(1, F), w2, bf2.reshape(1, C),
      g.reshape(1, C), b.reshape(1, C))


# ------------------------------ parameter init ------------------------------

def init_encoder_params(key, hidden, filt, n_layers):
    def xavier(k, cin, cout):
        lim = math.sqrt(6.0 / (cin + cout))
        return jax.random.uniform(k, (cin, cout), jnp.float32, -lim, lim)

    def conv_w(k, cin, cout):
        lim = 1.0 / math.sqrt(cin)
        return jax.random.uniform(k, (cin, cout), jnp.float32, -lim, lim)

    def conv_b(k, cin, cout):
        lim = 1.0 / math.sqrt(cin)
        return jax.random.uniform(k, (cout,), jnp.float32, -lim, lim)

    layers = []
    for i in range(n_layers):
        ks = jax.random.split(jax.random.fold_in(key, i), 12)
        wk = xavier(ks[2], hidden, hidden); bk = conv_b(ks[3], hidden, hidden)
        wv = xavier(ks[4], hidden, hidden); bv = conv_b(ks[5], hidden, hidden)
        layers.append(dict(
            wq=xavier(ks[0], hidden, hidden), bq=conv_b(ks[1], hidden, hidden),
            wkv=jnp.concatenate([wk, wv], axis=1),          # [C, 2C]
            bkv=jnp.concatenate([bk, bv], axis=0),          # [2C]
            wo=conv_w(ks[6], hidden, hidden), bo=conv_b(ks[7], hidden, hidden),
            g1=jnp.ones((hidden,), jnp.float32), b1=jnp.zeros((hidden,), jnp.float32),
            w1=conv_w(ks[8], hidden, filt), bf1=conv_b(ks[9], hidden, filt),
            w2=conv_w(ks[10], filt, hidden), bf2=conv_b(ks[11], filt, hidden),
            g2=jnp.ones((hidden,), jnp.float32), b2=jnp.zeros((hidden,), jnp.float32),
        ))
    return layers


# ------------------------------ Encoder forward ------------------------------

def encoder_forward(layers, x, x_mask, n_heads, compute_dtype=jnp.float32):
    """x: [B, T, C] float32, x_mask: [B, T, 1] float32 (0/1)."""
    B, T, C = x.shape
    dk = C // n_heads
    scale = 1.0 / math.sqrt(dk)

    t_pad, tq, tk = _attn_tiles(T)
    if t_pad != T:
        x = jnp.pad(x, ((0, 0), (0, t_pad - T), (0, 0)))
        x_mask = jnp.pad(x_mask, ((0, 0), (0, t_pad - T), (0, 0)))
    N = B * t_pad
    tile_n = _pick_row_tile(N)

    mask2d = x_mask.reshape(N, 1)
    # Additive key-side attention bias: 0 where valid, -1e4 where padded.
    attn_bias = ((x_mask - 1.0) * 1e4).reshape(B, 1, t_pad)

    cast = lambda w: w.astype(compute_dtype)

    n_layers = len(layers)
    for li, p in enumerate(layers):
        first = (li == 0)
        last = (li == n_layers - 1)
        # Fused Q and K|V projections; 1/sqrt(dk) folded into Wq / bq.
        q2d, kv2d = qkv_proj(x.reshape(N, C), mask2d,
                             cast(p["wq"] * scale), p["bq"] * scale,
                             cast(p["wkv"]), p["bkv"],
                             mask_in=first, tile_n=tile_n,
                             compute_dtype=compute_dtype)
        # Flash attention + conv_o + residual + LayerNorm.
        x = attn_block(q2d.reshape(B, t_pad, C), kv2d.reshape(B, t_pad, 2 * C),
                       attn_bias, x, x_mask,
                       cast(p["wo"]), p["bo"], p["g1"], p["b1"],
                       n_heads=n_heads, mask_residual=first,
                       tq=tq, tk=tk, compute_dtype=compute_dtype)
        # FFN + residual + LayerNorm (last layer also applies the output mask).
        x = ffn_ln(x.reshape(N, C), mask2d,
                   cast(p["w1"]), p["bf1"], cast(p["w2"]), p["bf2"],
                   p["g2"], p["b2"],
                   mask_out=last, tile_n=tile_n,
                   compute_dtype=compute_dtype).reshape(B, t_pad, C)
    return x[:, :T, :]


# ------------------------------ pure-JAX reference ------------------------------

def encoder_ref(layers, x, x_mask, n_heads):
    B, T, C = x.shape
    dk = C // n_heads
    am = x_mask[:, :, 0]                                        # [B, T]
    attn_mask = am[:, None, :, None] * am[:, None, None, :]     # [B, 1, T, T]

    def ln(h, g, b, eps=1e-5):
        mean = jnp.mean(h, -1, keepdims=True)
        var = jnp.mean((h - mean) ** 2, -1, keepdims=True)
        return (h - mean) / jnp.sqrt(var + eps) * g + b

    x = x * x_mask
    for p in layers:
        q = x @ p["wq"] + p["bq"]
        kv = x @ p["wkv"] + p["bkv"]
        k, v = kv[..., :C], kv[..., C:]
        qh = q.reshape(B, T, n_heads, dk).transpose(0, 2, 1, 3)
        kh = k.reshape(B, T, n_heads, dk).transpose(0, 2, 1, 3)
        vh = v.reshape(B, T, n_heads, dk).transpose(0, 2, 1, 3)
        scores = jnp.einsum("bhtd,bhsd->bhts", qh, kh) / math.sqrt(dk)
        scores = jnp.where(attn_mask == 0, -1e4, scores)
        pa = jax.nn.softmax(scores, axis=-1)
        out = jnp.einsum("bhts,bhsd->bhtd", pa, vh)
        a = out.transpose(0, 2, 1, 3).reshape(B, T, C)
        y = a @ p["wo"] + p["bo"]
        x = ln(x + y, p["g1"], p["b1"])
        h = jnp.maximum((x * x_mask) @ p["w1"] + p["bf1"], 0.0)
        y = ((h * x_mask) @ p["w2"] + p["bf2"]) * x_mask
        x = ln(x + y, p["g2"], p["b2"])
    return x * x_mask


# ------------------------------ main ------------------------------

if __name__ == "__main__":
    B, T = 2, 16
    hidden, filt, n_heads, n_layers = 32, 64, 4, 2

    key = jax.random.PRNGKey(0)
    kx, kp = jax.random.split(key)

    x = jax.random.normal(kx, (B, T, hidden), jnp.float32)  # PyTorch equiv: [B, hidden, T]
    lengths = jnp.array([16, 11])
    x_mask = (jnp.arange(T)[None, :] < lengths[:, None]).astype(jnp.float32)[:, :, None]

    layers = init_encoder_params(kp, hidden, filt, n_layers)
    ref = encoder_ref(layers, x, x_mask, n_heads)

    # f32 path (bit-faithful up to the EUP approx reciprocal in the softmax).
    out = jax.block_until_ready(encoder_forward(layers, x, x_mask, n_heads))
    assert out.shape == (B, T, hidden)
    err = float(jnp.max(jnp.abs(out - ref)))
    assert err < 5e-3, f"f32 max abs error {err}"

    # bf16 MXU-operand path (v6e/v7x): f32 accumulation + f32 softmax/LN stats.
    out_bf16 = jax.block_until_ready(
        encoder_forward(layers, x, x_mask, n_heads, compute_dtype=jnp.bfloat16))
    err_bf16 = float(jnp.max(jnp.abs(out_bf16 - ref)))
    assert bool(jnp.all(jnp.isfinite(out_bf16)))
    assert err_bf16 < 0.3, f"bf16 max abs error {err_bf16}"

    print("KERNEL_OK")
</pallas_src>

<mosaic_0001>
module attributes {stable_mosaic.version = 11 : i64} {
  func.func @_qkv_proj_kernel(%arg0: i32, %arg1: memref<32x32xf32, #tpu.memory_space<vmem>>, %arg2: memref<32x1xf32, #tpu.memory_space<vmem>>, %arg3: memref<32x32xf32, #tpu.memory_space<vmem>>, %arg4: memref<1x32xf32, #tpu.memory_space<vmem>>, %arg5: memref<32x64xf32, #tpu.memory_space<vmem>>, %arg6: memref<1x64xf32, #tpu.memory_space<vmem>>, %arg7: memref<32x32xf32, #tpu.memory_space<vmem>>, %arg8: memref<32x64xf32, #tpu.memory_space<vmem>>) attributes {dimension_semantics = [#tpu.dimension_semantics<parallel>], iteration_bounds = array<i64: 1>, scalar_prefetch = 0 : i64, scratch_operands = 0 : i64, tpu.core_type = #tpu.core_type<tc>, window_params = [{transform_indices = @transform_0, window_bounds = array<i64: 32, 32>}, {transform_indices = @transform_1, window_bounds = array<i64: 32, 1>}, {pipeline_mode = #tpu.pipeline_mode<synchronous>, transform_indices = @transform_2, window_bounds = array<i64: 32, 32>}, {pipeline_mode = #tpu.pipeline_mode<synchronous>, transform_indices = @transform_3, window_bounds = array<i64: 1, 32>}, {pipeline_mode = #tpu.pipeline_mode<synchronous>, transform_indices = @transform_4, window_bounds = array<i64: 32, 64>}, {pipeline_mode = #tpu.pipeline_mode<synchronous>, transform_indices = @transform_5, window_bounds = array<i64: 1, 64>}, {transform_indices = @transform_6, window_bounds = array<i64: 32, 32>}, {transform_indices = @transform_7, window_bounds = array<i64: 32, 64>}]} {
    %c0 = arith.constant 0 : index
    %c0_0 = arith.constant 0 : index
    %0 = vector.load %arg1[%c0, %c0_0] : memref<32x32xf32, #tpu.memory_space<vmem>>, vector<32x32xf32>
    %c0_1 = arith.constant 0 : index
    %c0_2 = arith.constant 0 : index
    %1 = vector.load %arg2[%c0_1, %c0_2] : memref<32x1xf32, #tpu.memory_space<vmem>>, vector<32x1xf32>
    %2 = vector.broadcast %1 : vector<32x1xf32> to vector<32x32xf32>
    %3 = arith.mulf %0, %2 : vector<32x32xf32>
    %c0_3 = arith.constant 0 : index
    %c0_4 = arith.constant 0 : index
    %4 = vector.load %arg3[%c0_3, %c0_4] : memref<32x32xf32, #tpu.memory_space<vmem>>, vector<32x32xf32>
    %cst = arith.constant dense<0.000000e+00> : vector<32x32xf32>
    %5 = tpu.matmul %3, %4, %cst {dimension_numbers = #tpu.dot_dimension_numbers<[1], [0], [0], [1], [0, 0, 1, 1], [], []>} : vector<32x32xf32>, vector<32x32xf32>, vector<32x32xf32> -> vector<32x32xf32>
    %c0_5 = arith.constant 0 : index
    %c0_6 = arith.constant 0 : index
    %6 = vector.load %arg4[%c0_5, %c0_6] : memref<1x32xf32, #tpu.memory_space<vmem>>, vector<1x32xf32>
    %7 = vector.broadcast %6 : vector<1x32xf32> to vector<32x32xf32>
    %8 = arith.addf %5, %7 : vector<32x32xf32>
    %c0_7 = arith.constant 0 : index
    %c0_8 = arith.constant 0 : index
    %9 = vector.load %arg5[%c0_7, %c0_8] : memref<32x64xf32, #tpu.memory_space<vmem>>, vector<32x64xf32>
    %cst_9 = arith.constant dense<0.000000e+00> : vector<32x64xf32>
    %10 = tpu.matmul %3, %9, %cst_9 {dimension_numbers = #tpu.dot_dimension_numbers<[1], [0], [0], [1], [0, 0, 1, 1], [], []>} : vector<32x32xf32>, vector<32x64xf32>, vector<32x64xf32> -> vector<32x64xf32>
    %c0_10 = arith.constant 0 : index
    %c0_11 = arith.constant 0 : index
    %11 = vector.load %arg6[%c0_10, %c0_11] : memref<1x64xf32, #tpu.memory_space<vmem>>, vector<1x64xf32>
    %12 = vector.broadcast %11 : vector<1x64xf32> to vector<32x64xf32>
    %13 = arith.addf %10, %12 : vector<32x64xf32>
    %c0_12 = arith.constant 0 : index
    %c0_13 = arith.constant 0 : index
    %14 = vector.load %arg7[%c0_12, %c0_13] : memref<32x32xf32, #tpu.memory_space<vmem>>, vector<32x32xf32>
    tpu.vector_store %arg7[%c0_12, %c0_13], %8 {strides = array<i32>} : memref<32x32xf32, #tpu.memory_space<vmem>>, vector<32x32xf32>,
    %c0_14 = arith.constant 0 : index
    %c0_15 = arith.constant 0 : index
    %15 = vector.load %arg8[%c0_14, %c0_15] : memref<32x64xf32, #tpu.memory_space<vmem>>, vector<32x64xf32>
    tpu.vector_store %arg8[%c0_14, %c0_15], %13 {strides = array<i32>} : memref<32x64xf32, #tpu.memory_space<vmem>>, vector<32x64xf32>,
    return
  }
  func.func @transform_0(%arg0: i32) -> (i32, i32) {
    %c0_i32 = arith.constant 0 : i32
    %c0_i32_0 = arith.constant 0 : i32
    return %arg0, %c0_i32 : i32, i32
  }
  func.func @transform_1(%arg0: i32) -> (i32, i32) {
    %c0_i32 = arith.constant 0 : i32
    %c0_i32_0 = arith.constant 0 : i32
    return %arg0, %c0_i32 : i32, i32
  }
  func.func @transform_2(%arg0: i32) -> (i32, i32) {
    %c0_i32 = arith.constant 0 : i32
    %c0_i32_0 = arith.constant 0 : i32
    %c0_i32_1 = arith.constant 0 : i32
    return %c0_i32, %c0_i32_0 : i32, i32
  }
  func.func @transform_3(%arg0: i32) -> (i32, i32) {
    %c0_i32 = arith.constant 0 : i32
    %c0_i32_0 = arith.constant 0 : i32
    %c0_i32_1 = arith.constant 0 : i32
    return %c0_i32, %c0_i32_0 : i32, i32
  }
  func.func @transform_4(%arg0: i32) -> (i32, i32) {
    %c0_i32 = arith.constant 0 : i32
    %c0_i32_0 = arith.constant 0 : i32
    %c0_i32_1 = arith.constant 0 : i32
    return %c0_i32, %c0_i32_0 : i32, i32
  }
  func.func @transform_5(%arg0: i32) -> (i32, i32) {
    %c0_i32 = arith.constant 0 : i32
    %c0_i32_0 = arith.constant 0 : i32
    %c0_i32_1 = arith.constant 0 : i32
    return %c0_i32, %c0_i32_0 : i32, i32
  }
  func.func @transform_6(%arg0: i32) -> (i32, i32) {
    %c0_i32 = arith.constant 0 : i32
    %c0_i32_0 = arith.constant 0 : i32
    return %arg0, %c0_i32 : i32, i32
  }
  func.func @transform_7(%arg0: i32) -> (i32, i32) {
    %c0_i32 = arith.constant 0 : i32
    %c0_i32_0 = arith.constant 0 : i32
    return %arg0, %c0_i32 : i32, i32
  }
}

</mosaic_0001>

<llo_original>
// kernel: tpu_custom_call.1
$region0: #{tpu_custom_call.1}
  #allocation0 [shape = 'u32[]', space=smem, size = 0x4, offset = 0x4, fixed_abs, tag = 'smem constant byte address 0x4 - core index']
  #allocation1 [shape = 'u32[144,128]{1,0:T(1,128)}', space=vmem, size = 0x12000, scoped, tag = 'internal scratch']
  %s0 = inlined_call_operand.vmem [shape: f32[32,32], index: 0, kind: input, shape index: {}]
  %s1 = inlined_call_operand.vmem [shape: f32[32,1], index: 1, kind: input, shape index: {}]
  %s2 = inlined_call_operand.hbm [shape: f32[32,32], index: 2, kind: input, shape index: {}]
  %s3 = inlined_call_operand.vmem [shape: f32[1,32], index: 3, kind: input, shape index: {}]
  %s4 = inlined_call_operand.hbm [shape: f32[32,64], index: 4, kind: input, shape index: {}]
  %s5 = inlined_call_operand.vmem [shape: f32[1,64], index: 5, kind: input, shape index: {}]
  %s6 = inlined_call_operand.hbm [shape: f32[32,32], index: 6, kind: output, shape index: {0}]
  %s7 = inlined_call_operand.hbm [shape: f32[32,64], index: 7, kind: output, shape index: {1}]
  %8 = xla_tuple %s6, %s7
  %s9 = sld [smem:[#allocation0]]
  $region50: #{tpu_custom_call.1} parent=0
    _
  %s11 = ssub.s32 1, %s9
  %s12 = scalar_select 0, %s11, %s9
  $region1: #{tpu_custom_call.1} parent=0
    #allocation2 [shape = 'u8[16384]{0}', space=vmem, size = 0x4000, scoped, tag = 'input window, operand 2, single buffered']
    #allocation3 [shape = 's32[1]{0}', space=sflag, size = 0x4, scoped, tag = 'scoped memory for tpu_custom_call.1']
    #allocation4 [shape = 's32[1]{0}', space=sflag, size = 0x4, scoped, tag = 'scoped memory for tpu_custom_call.1']
    #allocation5 [shape = 'u8[16384]{0}', space=vmem, size = 0x4000, scoped, tag = 'input window, operand 4, single buffered']
    #allocation6 [shape = 's32[1]{0}', space=sflag, size = 0x4, scoped, tag = 'scoped memory for tpu_custom_call.1']
    #allocation7 [shape = 'u8[16384]{0}', space=vmem, size = 0x4000, scoped, tag = 'output window, operand 0, single buffered']
    #allocation8 [shape = 'u8[16384]{0}', space=vmem, size = 0x4000, scoped, tag = 'output window, operand 1, single buffered']
    #allocation9 [shape = 's32[1]{0}', space=sflag, size = 0x4, scoped, tag = 'scoped memory for tpu_custom_call.1']
    %13 = vsyncpa [#allocation3], 0
    %14 = vsyncpa [#allocation6], 0
    %15 = vsyncpa [#allocation4], 0
    %16 = vsyncpa [#allocation9], 0
    // Predicated region
    $region2: #{tpu_custom_call.1} parent=1 // pred_check
      _
    $region3: #{tpu_custom_call.1} parent=1 // pred_check_branch
      %18 = sbr.rel (0) target = $region5
    $region4: #{tpu_custom_call.1} parent=1 // pred_region
      _
    $region5: #{tpu_custom_call.1} parent=1 // pred_fallthru
      _
    // Predicated region
    $region6: #{tpu_custom_call.1} parent=1 // pred_check
      _
    $region7: #{tpu_custom_call.1} parent=1 // pred_check_branch
      %20 = sbr.rel (0) target = $region9
    $region8: #{tpu_custom_call.1} parent=1 // pred_region
      _
    $region9: #{tpu_custom_call.1} parent=1 // pred_fallthru
      _
    // Predicated region
    $region10: #{tpu_custom_call.1} parent=1 // pred_check
      _
    $region11: #{tpu_custom_call.1} parent=1 // pred_check_branch
      %22 = sbr.rel (0) target = $region13
    $region12: #{tpu_custom_call.1} parent=1 // pred_region
      %s24 = ssub.s32 512, 512
      %25 = vsyncadd [#allocation3], %s24
      %s26 = sshll.u32 [#allocation2], 4
      %s27 = int_to_ptr.vmem [resolvable:$true] %s26
      %32 = dma.hbm_to_vmem [thread:$0]  %s2, 512, %s27, [#allocation3], 128, 128, 8
    $region13: #{tpu_custom_call.1} parent=1 // pred_fallthru
      _
    // Predicated region
    $region14: #{tpu_custom_call.1} parent=1 // pred_check
      _
    $region15: #{tpu_custom_call.1} parent=1 // pred_check_branch
      %34 = sbr.rel (0) target = $region17
    $region16: #{tpu_custom_call.1} parent=1 // pred_region
      _
    $region17: #{tpu_custom_call.1} parent=1 // pred_fallthru
      _
    // Predicated region
    $region18: #{tpu_custom_call.1} parent=1 // pred_check
      _
    $region19: #{tpu_custom_call.1} parent=1 // pred_check_branch
      %36 = sbr.rel (0) target = $region21
    $region20: #{tpu_custom_call.1} parent=1 // pred_region
      %s38 = ssub.s32 512, 512
      %39 = vsyncadd [#allocation6], %s38
      %s40 = sshll.u32 [#allocation5], 4
      %s41 = int_to_ptr.vmem [resolvable:$true] %s40
      %46 = dma.hbm_to_vmem [thread:$0]  %s4, 512, %s41, [#allocation6], 128, 128, 8
    $region21: #{tpu_custom_call.1} parent=1 // pred_fallthru
      _
    // Predicated region
    $region22: #{tpu_custom_call.1} parent=1 // pred_check
      _
    $region23: #{tpu_custom_call.1} parent=1 // pred_check_branch
      %48 = sbr.rel (0) target = $region25
    $region24: #{tpu_custom_call.1} parent=1 // pred_region
      _
    $region25: #{tpu_custom_call.1} parent=1 // pred_fallthru
      _
    // Predicated region
    $region26: #{tpu_custom_call.1} parent=1 // pred_check
      _
    $region27: #{tpu_custom_call.1} parent=1 // pred_check_branch
      %50 = sbr.rel (0) target = $region29
    $region28: #{tpu_custom_call.1} parent=1 // pred_region
      %51 = dma.done [#allocation3], 512
    $region29: #{tpu_custom_call.1} parent=1 // pred_fallthru
      _
    // Predicated region
    $region30: #{tpu_custom_call.1} parent=1 // pred_check
      _
    $region31: #{tpu_custom_call.1} parent=1 // pred_check_branch
      %53 = sbr.rel (0) target = $region33
    $region32: #{tpu_custom_call.1} parent=1 // pred_region
      %54 = dma.done [#allocation6], 512
    $region33: #{tpu_custom_call.1} parent=1 // pred_fallthru
      _
    %v55 = vld [vmem:[%s0] sm:$0xff]
    %v56 = vld [vmem:[%s0 + $0x8] sm:$0xff]
    %v57 = vld [vmem:[%s0 + $0x10] sm:$0xff]
    %v58 = vld [vmem:[%s0 + $0x18] sm:$0xff]
    %v59 = vld [vmem:[%s1] sm:$0xff]
    %v60 = vld [vmem:[%s1 + $0x8] sm:$0xff]
    %v61 = vld [vmem:[%s1 + $0x10] sm:$0xff]
    %v62 = vld [vmem:[%s1 + $0x18] sm:$0xff]
    %64 = vset.pattern.permute.xlu0 0
    %65 = vperm.xlu0 %64, %v59
    %v66 = vpop.permute.xlu0 %65
    %69 = vset.pattern.permute.xlu0 0
    %70 = vperm.xlu0 %69, %v60
    %v71 = vpop.permute.xlu0 %70
    %74 = vset.pattern.permute.xlu0 0
    %75 = vperm.xlu0 %74, %v61
    %v76 = vpop.permute.xlu0 %75
    %79 = vset.pattern.permute.xlu0 0
    %80 = vperm.xlu0 %79, %v62
    %v81 = vpop.permute.xlu0 %80
    %v83 = vmul.f32 %v55, %v66
    %v84 = vmul.f32 %v56, %v71
    %v85 = vmul.f32 %v57, %v76
    %v86 = vmul.f32 %v58, %v81
    %v87 = vld [vmem:[#allocation2] sm:$0xff]
    %v88 = vld [vmem:[#allocation2 + $0x8] sm:$0xff]
    %v89 = vld [vmem:[#allocation2 + $0x10] sm:$0xff]
    %v90 = vld [vmem:[#allocation2 + $0x18] sm:$0xff]
    %v91 = vld [vmem:[%s3] sm:$0x1]
    %v93 = vlaneseq
    %v94 = vshrl.u32 %v93, 7
    %v95 = vsub.s32 0, %v94
    %v96 = vrot.slane %v91, %v95
    %vm98 = vcmask 261120
    %v100 = vsel %vm98, %v83, 0
    %v103 = vsel %vm98, %v84, 0
    %v106 = vsel %vm98, %v85, 0
    %v109 = vsel %vm98, %v86, 0
    %111 = vmatprep.subr.mxu0 0.0
    %112 = vmatpush1.msra.mxu0 %v87
    %113 = vmatprep.subr.mxu0 0.0
    %114 = vmatpush1.msra.mxu0 %v88
    %115 = vmatprep.subr.mxu0 0.0
    %116 = vmatpush1.msra.mxu0 %v89
    %117 = vmatprep.subr.mxu0 0.0
    %118 = vmatpush1.msra.mxu0 %v90
    %119 = vmatprep.subr.mxu0 0.0
    %120 = vmatpush1.msra.mxu0 0.0
    %121 = vmatprep.subr.mxu0 0.0
    %122 = vmatpush1.msra.mxu0 0.0
    %123 = vmatprep.subr.mxu0 0.0
    %124 = vmatpush1.msra.mxu0 0.0
    %125 = vmatprep.subr.mxu0 0.0
    %126 = vmatpush1.msra.mxu0 0.0
    %127 = vmatprep.subr.mxu0 0.0
    %128 = vmatpush1.msra.mxu0 0.0
    %129 = vmatprep.subr.mxu0 0.0
    %130 = vmatpush1.msra.mxu0 0.0
    %131 = vmatprep.subr.mxu0 0.0
    %132 = vmatpush1.msra.mxu0 0.0
    %133 = vmatprep.subr.mxu0 0.0
    %134 = vmatpush1.msra.mxu0 0.0
    %135 = vmatprep.subr.mxu0 0.0
    %136 = vmatpush1.msra.mxu0 0.0
    %137 = vmatprep.subr.mxu0 0.0
    %138 = vmatpush1.msra.mxu0 0.0
    %139 = vmatprep.subr.mxu0 0.0
    %140 = vmatpush1.msra.mxu0 0.0
    %141 = vmatprep.subr.mxu0 0.0
    %142 = vmatpush1.msra.mxu0 0.0
    %143 = vmatprep.subr.mxu0 0.0
    %144 = vmatpush1.msra.mxu0 0.0
    %145 = vmatprep.subr.mxu0 0.0
    %146 = vmatpush1.msra.mxu0 0.0
    %147 = vmatprep.subr.mxu0 0.0
    %148 = vmatpush1.msra.mxu0 0.0
    %149 = vmatprep.subr.mxu0 0.0
    %150 = vmatpush1.msra.mxu0 0.0
    %151 = vmatprep.subr.mxu0 0.0
    %152 = vmatpush1.msra.mxu0 0.0
    %153 = vmatprep.subr.mxu0 0.0
    %154 = vmatpush1.msra.mxu0 0.0
    %155 = vmatprep.subr.mxu0 0.0
    %156 = vmatpush1.msra.mxu0 0.0
    %157 = vmatprep.subr.mxu0 0.0
    %158 = vmatpush1.msra.mxu0 0.0
    %159 = vmatprep.subr.mxu0 0.0
    %160 = vmatpush1.msra.mxu0 0.0
    %161 = vmatprep.subr.mxu0 0.0
    %162 = vmatpush1.msra.mxu0 0.0
    %163 = vmatprep.subr.mxu0 0.0
    %164 = vmatpush1.msra.mxu0 0.0
    %165 = vmatprep.subr.mxu0 0.0
    %166 = vmatpush1.msra.mxu0 0.0
    %167 = vmatprep.subr.mxu0 0.0
    %168 = vmatpush1.msra.mxu0 0.0
    %169 = vmatprep.subr.mxu0 0.0
    %170 = vmatpush1.msra.mxu0 0.0
    %171 = vmatprep.subr.mxu0 0.0
    %172 = vmatpush1.msra.mxu0 0.0
    %173 = vmatprep.subr.mxu0 0.0
    %174 = vmatpush1.msra.mxu0 0.0
    %175 = vmatprep.mubr.f32.mxu0 0.0
    %176 = vmatmul.mubr.f32.gmra.mrb[0].mxu0 %v100
    %v177 = vpop.f32.mrb[0].mxu0
    %v178 = vadd.f32 %v96, %v177
    %v179 = vpop.f32.mrb[0].mxu0
    %180 = vmatprep.mubr.f32.mxu0 0.0
    %181 = vmatmul.mubr.f32.gmra.mrb[0].mxu0 %v103
    %v182 = vpop.f32.mrb[0].mxu0
    %v183 = vadd.f32 %v96, %v182
    %v184 = vpop.f32.mrb[0].mxu0
    %185 = vmatprep.mubr.f32.mxu0 0.0
    %186 = vmatmul.mubr.f32.gmra.mrb[0].mxu0 %v106
    %v187 = vpop.f32.mrb[0].mxu0
    %v188 = vadd.f32 %v96, %v187
    %v189 = vpop.f32.mrb[0].mxu0
    %190 = vmatprep.mubr.f32.mxu0 0.0
    %191 = vmatmul.mubr.f32.gmra.mrb[0].mxu0 %v109
    %v192 = vpop.f32.mrb[0].mxu0
    %v193 = vadd.f32 %v96, %v192
    %v194 = vpop.f32.mrb[0].mxu0
    %195 = vdwg.mxu0
    %v196 = vld [vmem:[#allocation5] sm:$0xff]
    %v197 = vld [vmem:[#allocation5 + $0x8] sm:$0xff]
    %v198 = vld [vmem:[#allocation5 + $0x10] sm:$0xff]
    %v199 = vld [vmem:[#allocation5 + $0x18] sm:$0xff]
    %v200 = vld [vmem:[%s5] sm:$0x1]
    %v202 = vlaneseq
    %v203 = vshrl.u32 %v202, 7
    %v204 = vsub.s32 0, %v203
    %v205 = vrot.slane %v200, %v204
    %207 = vmatprep.subr.mxu0 0.0
    %208 = vmatpush1.msra.mxu0 %v196
    %209 = vmatprep.subr.mxu0 0.0
    %210 = vmatpush1.msra.mxu0 %v197
    %211 = vmatprep.subr.mxu0 0.0
    %212 = vmatpush1.msra.mxu0 %v198
    %213 = vmatprep.subr.mxu0 0.0
    %214 = vmatpush1.msra.mxu0 %v199
    %215 = vmatprep.subr.mxu0 0.0
    %216 = vmatpush1.msra.mxu0 0.0
    %217 = vmatprep.subr.mxu0 0.0
    %218 = vmatpush1.msra.mxu0 0.0
    %219 = vmatprep.subr.mxu0 0.0
    %220 = vmatpush1.msra.mxu0 0.0
    %221 = vmatprep.subr.mxu0 0.0
    %222 = vmatpush1.msra.mxu0 0.0
    %223 = vmatprep.subr.mxu0 0.0
    %224 = vmatpush1.msra.mxu0 0.0
    %225 = vmatprep.subr.mxu0 0.0
    %226 = vmatpush1.msra.mxu0 0.0
    %227 = vmatprep.subr.mxu0 0.0
    %228 = vmatpush1.msra.mxu0 0.0
    %229 = vmatprep.subr.mxu0 0.0
    %230 = vmatpush1.msra.mxu0 0.0
    %231 = vmatprep.subr.mxu0 0.0
    %232 = vmatpush1.msra.mxu0 0.0
    %233 = vmatprep.subr.mxu0 0.0
    %234 = vmatpush1.msra.mxu0 0.0
    %235 = vmatprep.subr.mxu0 0.0
    %236 = vmatpush1.msra.mxu0 0.0
    %237 = vmatprep.subr.mxu0 0.0
    %238 = vmatpush1.msra.mxu0 0.0
    %239 = vmatprep.subr.mxu0 0.0
    %240 = vmatpush1.msra.mxu0 0.0
    %241 = vmatprep.subr.mxu0 0.0
    %242 = vmatpush1.msra.mxu0 0.0
    %243 = vmatprep.subr.mxu0 0.0
    %244 = vmatpush1.msra.mxu0 0.0
    %245 = vmatprep.subr.mxu0 0.0
    %246 = vmatpush1.msra.mxu0 0.0
    %247 = vmatprep.subr.mxu0 0.0
    %248 = vmatpush1.msra.mxu0 0.0
    %249 = vmatprep.subr.mxu0 0.0
    %250 = vmatpush1.msra.mxu0 0.0
    %251 = vmatprep.subr.mxu0 0.0
    %252 = vmatpush1.msra.mxu0 0.0
    %253 = vmatprep.subr.mxu0 0.0
    %254 = vmatpush1.msra.mxu0 0.0
    %255 = vmatprep.subr.mxu0 0.0
    %256 = vmatpush1.msra.mxu0 0.0
    %257 = vmatprep.subr.mxu0 0.0
    %258 = vmatpush1.msra.mxu0 0.0
    %259 = vmatprep.subr.mxu0 0.0
    %260 = vmatpush1.msra.mxu0 0.0
    %261 = vmatprep.subr.mxu0 0.0
    %262 = vmatpush1.msra.mxu0 0.0
    %263 = vmatprep.subr.mxu0 0.0
    %264 = vmatpush1.msra.mxu0 0.0
    %265 = vmatprep.subr.mxu0 0.0
    %266 = vmatpush1.msra.mxu0 0.0
    %267 = vmatprep.subr.mxu0 0.0
    %268 = vmatpush1.msra.mxu0 0.0
    %269 = vmatprep.subr.mxu0 0.0
    %270 = vmatpush1.msra.mxu0 0.0
    %271 = vmatprep.mubr.f32.mxu0 0.0
    %272 = vmatmul.mubr.f32.gmra.mrb[0].mxu0 %v100
    %v273 = vpop.f32.mrb[0].mxu0
    %v274 = vadd.f32 %v205, %v273
    %v275 = vpop.f32.mrb[0].mxu0
    %276 = vmatprep.mubr.f32.mxu0 0.0
    %277 = vmatmul.mubr.f32.gmra.mrb[0].mxu0 %v103
    %v278 = vpop.f32.mrb[0].mxu0
    %v279 = vadd.f32 %v205, %v278
    %v280 = vpop.f32.mrb[0].mxu0
    %281 = vmatprep.mubr.f32.mxu0 0.0
    %282 = vmatmul.mubr.f32.gmra.mrb[0].mxu0 %v106
    %v283 = vpop.f32.mrb[0].mxu0
    %v284 = vadd.f32 %v205, %v283
    %v285 = vpop.f32.mrb[0].mxu0
    %286 = vmatprep.mubr.f32.mxu0 0.0
    %287 = vmatmul.mubr.f32.gmra.mrb[0].mxu0 %v109
    %v288 = vpop.f32.mrb[0].mxu0
    %v289 = vadd.f32 %v205, %v288
    %v290 = vpop.f32.mrb[0].mxu0
    %291 = vdwg.mxu0
    %292 = vst.msk [vmem:[#allocation7] sm:$0xff] %vm98, %v178
    %293 = vst.msk [vmem:[#allocation7 + $0x8] sm:$0xff] %vm98, %v183
    %294 = vst.msk [vmem:[#allocation7 + $0x10] sm:$0xff] %vm98, %v188
    %295 = vst.msk [vmem:[#allocation7 + $0x18] sm:$0xff] %vm98, %v193
    %vm296 = vcmask 523264
    %297 = vst.msk [vmem:[#allocation8] sm:$0xff] %vm296, %v274
    %298 = vst.msk [vmem:[#allocation8 + $0x8] sm:$0xff] %vm296, %v279
    %299 = vst.msk [vmem:[#allocation8 + $0x10] sm:$0xff] %vm296, %v284
    %300 = vst.msk [vmem:[#allocation8 + $0x18] sm:$0xff] %vm296, %v289
    // Predicated region
    $region34: #{tpu_custom_call.1} parent=1 // pred_check
      _
    $region35: #{tpu_custom_call.1} parent=1 // pred_check_branch
      %302 = sbr.rel (0) target = $region37
    $region36: #{tpu_custom_call.1} parent=1 // pred_region
      %s304 = ssub.s32 512, 512
      %305 = vsyncadd [#allocation4], %s304
      %s306 = sshll.u32 [#allocation7], 4
      %s307 = int_to_ptr.vmem [resolvable:$true] %s306
      %312 = dma.vmem_to_hbm [thread:$0]  %s307, 512, %s6, [#allocation4], 128, 128, 8
    $region37: #{tpu_custom_call.1} parent=1 // pred_fallthru
      _
    // Predicated region
    $region38: #{tpu_custom_call.1} parent=1 // pred_check
      _
    $region39: #{tpu_custom_call.1} parent=1 // pred_check_branch
      %314 = sbr.rel (0) target = $region41
    $region40: #{tpu_custom_call.1} parent=1 // pred_region
      %s316 = ssub.s32 512, 512
      %317 = vsyncadd [#allocation9], %s316
      %s318 = sshll.u32 [#allocation8], 4
      %s319 = int_to_ptr.vmem [resolvable:$true] %s318
      %324 = dma.vmem_to_hbm [thread:$0]  %s319, 512, %s7, [#allocation9], 128, 128, 8
    $region41: #{tpu_custom_call.1} parent=1 // pred_fallthru
      _
    // Predicated region
    $region42: #{tpu_custom_call.1} parent=1 // pred_check
      _
    $region43: #{tpu_custom_call.1} parent=1 // pred_check_branch
      %326 = sbr.rel (0) target = $region45
    $region44: #{tpu_custom_call.1} parent=1 // pred_region
      %327 = dma.done [#allocation4], 512
    $region45: #{tpu_custom_call.1} parent=1 // pred_fallthru
      _
    // Predicated region
    $region46: #{tpu_custom_call.1} parent=1 // pred_check
      _
    $region47: #{tpu_custom_call.1} parent=1 // pred_check_branch
      %329 = sbr.rel (0) target = $region49
    $region48: #{tpu_custom_call.1} parent=1 // pred_region
      %330 = dma.done [#allocation9], 512
    $region49: #{tpu_custom_call.1} parent=1 // pred_fallthru
      _
    %331 = vsyncpa [#allocation3], 1
    %332 = vsyncpa [#allocation6], 1
    %333 = vsyncpa [#allocation4], 1
    %334 = vsyncpa [#allocation9], 1

</llo_original>
